<compile_context>
chip_gen: v6e
topology: v6e:2x2x1
jax: 0.10.0
libtpu: 0.0.40
codegen_flags: <defaults>
</compile_context>

<pallas_src>
import jax
import jax.numpy as jnp
from jax.experimental import pallas as pl
from jax.experimental.pallas import tpu as pltpu

NUM_CLASSES = 10
IN_FEATURES = 1568  # 32 * 7 * 7

_VMEM_BUDGET = 40 << 20  # conservative across v5e/v6e (128 MiB phys) and v7x (64 MiB phys)


def _fc_kernel(x_ref, w_ref, b_ref, o_ref):
    # (TM, K) @ (K, N) + (1, N) -> (TM, N), f32 accumulation on the MXU.
    acc = jnp.dot(x_ref[...], w_ref[...], preferred_element_type=jnp.float32)
    o_ref[...] = (acc + b_ref[...]).astype(o_ref.dtype)


def _round_up(n, m):
    return ((n + m - 1) // m) * m


def _working_set_bytes(tm, itemsize):
    """Double-buffered VMEM footprint estimate for a row tile of size tm."""
    x_tile = tm * IN_FEATURES * itemsize
    out_tile = tm * 128 * 4              # output tile, lane-padded, f32
    w_res = 16 * IN_FEATURES * itemsize  # weight, sublane-padded, resident
    return 2 * (x_tile + out_tile) + 2 * w_res + (1 << 20)  # + slack


def exit1fc_pallas(x, weight, bias, *, block_m=2048):
    """y = x.view(-1, 1568) @ weight.T + bias   (PyTorch nn.Linear semantics).

    x:      any shape whose total element count is divisible by 1568
            (e.g. NCHW activations); dtype is used as-is (no extra HBM cast pass).
    weight: (10, 1568)  -- PyTorch nn.Linear layout (out_features, in_features)
    bias:   (10,)
    """
    x2d = x.reshape(-1, IN_FEATURES)                  # == x.view(-1, 1568), no dtype cast
    M = x2d.shape[0]
    itemsize = jnp.dtype(x2d.dtype).itemsize

    # One-time (tiny) weight transpose/cast outside the kernel: (10,1568) -> (1568,10).
    w = weight.astype(x2d.dtype).T
    b2d = bias.reshape(1, NUM_CLASSES).astype(jnp.float32)

    # --- row-tile selection -------------------------------------------------
    tm = min(block_m, _round_up(M, 8))                # sublane-aligned row tile
    # Shrink until the double-buffered working set fits the cross-generation budget.
    while tm > 8 and _working_set_bytes(tm, itemsize) > _VMEM_BUDGET:
        tm = max(8, _round_up(tm // 2, 8))
    # Keep >= 2 grid steps when M spans more than one natural tile, so the
    # "parallel" axis can shard rows across v7x's two TensorCores.
    if pl.cdiv(M, tm) == 1 and M > 8:
        tm = _round_up(pl.cdiv(M, 2), 8)
    grid = (pl.cdiv(M, tm),)

    # Raise scoped VMEM so the bigger tiles also compile on v5e's 16 MiB default.
    vmem_limit = int(min(max(_working_set_bytes(tm, itemsize) + (4 << 20), 32 << 20),
                         64 << 20))

    cost = pl.CostEstimate(
        flops=2 * M * IN_FEATURES * NUM_CLASSES,
        bytes_accessed=(M * IN_FEATURES * itemsize          # read x
                        + M * NUM_CLASSES * 4               # write y
                        + NUM_CLASSES * IN_FEATURES * itemsize  # read W
                        + NUM_CLASSES * 4),                 # read b
        transcendentals=0,
    )

    return pl.pallas_call(
        _fc_kernel,
        out_shape=jax.ShapeDtypeStruct((M, NUM_CLASSES), jnp.float32),
        grid=grid,
        in_specs=[
            pl.BlockSpec((tm, IN_FEATURES), lambda i: (i, 0)),            # row tile of x
            pl.BlockSpec((IN_FEATURES, NUM_CLASSES), lambda i: (0, 0)),   # weight, resident
            pl.BlockSpec((1, NUM_CLASSES), lambda i: (0, 0)),             # bias,   resident
        ],
        out_specs=pl.BlockSpec((tm, NUM_CLASSES), lambda i: (i, 0)),
        compiler_params=pltpu.CompilerParams(
            dimension_semantics=("parallel",),   # shard row tiles across v7x TCs
            vmem_limit_bytes=vmem_limit,
        ),
        cost_estimate=cost,
    )(x2d, w, b2d)


if __name__ == "__main__":
    key = jax.random.PRNGKey(0)
    kx, kw, kb, kx2 = jax.random.split(key, 4)

    # Small NCHW input whose per-sample flatten is exactly 1568 features:
    # (batch=2, channels=32, H=7, W=7)  ->  view(-1, 1568) gives (2, 1568).
    x = jax.random.normal(kx, (2, 32, 7, 7), dtype=jnp.float32)

    # Deterministic synthetic parameters, nn.Linear(1568, 10)-shaped.
    bound = 1.0 / (IN_FEATURES ** 0.5)
    weight = jax.random.uniform(kw, (NUM_CLASSES, IN_FEATURES),
                                minval=-bound, maxval=bound, dtype=jnp.float32)
    bias = jax.random.uniform(kb, (NUM_CLASSES,),
                              minval=-bound, maxval=bound, dtype=jnp.float32)

    out = jax.block_until_ready(exit1fc_pallas(x, weight, bias))
    ref = x.reshape(-1, IN_FEATURES) @ weight.T + bias
    assert out.shape == (2, NUM_CLASSES)
    assert jnp.allclose(out, ref, atol=2e-3, rtol=2e-3)

    # Exercise the multi-step grid (2-TC split + ragged last block) at a small size:
    # M=20 with the default block_m -> tm=16, grid=2 (last block ragged).
    x_big = jax.random.normal(kx2, (20, 32, 7, 7), dtype=jnp.float32)
    out_big = jax.block_until_ready(exit1fc_pallas(x_big, weight, bias))
    ref_big = x_big.reshape(-1, IN_FEATURES) @ weight.T + bias
    assert out_big.shape == (20, NUM_CLASSES)
    assert jnp.allclose(out_big, ref_big, atol=2e-3, rtol=2e-3)

    # Also exercise an explicitly tiny tile (3 grid steps, ragged last block).
    out_small_tile = jax.block_until_ready(exit1fc_pallas(x_big, weight, bias, block_m=8))
    assert jnp.allclose(out_small_tile, ref_big, atol=2e-3, rtol=2e-3)

    print("KERNEL_OK")
</pallas_src>

<mosaic_0001>
module attributes {stable_mosaic.version = 11 : i64} {
  func.func @_fc_kernel(%arg0: i32, %arg1: memref<8x1568xf32, #tpu.memory_space<vmem>>, %arg2: memref<1568x10xf32, #tpu.memory_space<vmem>>, %arg3: memref<1x10xf32, #tpu.memory_space<vmem>>, %arg4: memref<8x10xf32, #tpu.memory_space<vmem>>) attributes {dimension_semantics = [#tpu.dimension_semantics<parallel>], iteration_bounds = array<i64: 1>, scalar_prefetch = 0 : i64, scratch_operands = 0 : i64, tpu.core_type = #tpu.core_type<tc>, window_params = [{transform_indices = @transform_0, window_bounds = array<i64: 8, 1568>}, {pipeline_mode = #tpu.pipeline_mode<synchronous>, transform_indices = @transform_1, window_bounds = array<i64: 1568, 10>}, {pipeline_mode = #tpu.pipeline_mode<synchronous>, transform_indices = @transform_2, window_bounds = array<i64: 1, 10>}, {transform_indices = @transform_3, window_bounds = array<i64: 8, 10>}]} {
    %c0 = arith.constant 0 : index
    %c0_0 = arith.constant 0 : index
    %0 = vector.load %arg1[%c0, %c0_0] : memref<8x1568xf32, #tpu.memory_space<vmem>>, vector<8x1568xf32>
    %c0_1 = arith.constant 0 : index
    %c0_2 = arith.constant 0 : index
    %1 = vector.load %arg2[%c0_1, %c0_2] : memref<1568x10xf32, #tpu.memory_space<vmem>>, vector<1568x10xf32>
    %cst = arith.constant dense<0.000000e+00> : vector<8x10xf32>
    %2 = tpu.matmul %0, %1, %cst {dimension_numbers = #tpu.dot_dimension_numbers<[1], [0], [0], [1], [0, 0, 1, 1], [], []>} : vector<8x1568xf32>, vector<1568x10xf32>, vector<8x10xf32> -> vector<8x10xf32>
    %c0_3 = arith.constant 0 : index
    %c0_4 = arith.constant 0 : index
    %3 = vector.load %arg3[%c0_3, %c0_4] : memref<1x10xf32, #tpu.memory_space<vmem>>, vector<1x10xf32>
    %4 = vector.broadcast %3 : vector<1x10xf32> to vector<8x10xf32>
    %5 = arith.addf %2, %4 : vector<8x10xf32>
    %c0_5 = arith.constant 0 : index
    %c0_6 = arith.constant 0 : index
    %6 = vector.load %arg4[%c0_5, %c0_6] : memref<8x10xf32, #tpu.memory_space<vmem>>, vector<8x10xf32>
    tpu.vector_store %arg4[%c0_5, %c0_6], %5 {strides = array<i32>} : memref<8x10xf32, #tpu.memory_space<vmem>>, vector<8x10xf32>,
    return
  }
  func.func @transform_0(%arg0: i32) -> (i32, i32) {
    %c0_i32 = arith.constant 0 : i32
    %c0_i32_0 = arith.constant 0 : i32
    return %arg0, %c0_i32 : i32, i32
  }
  func.func @transform_1(%arg0: i32) -> (i32, i32) {
    %c0_i32 = arith.constant 0 : i32
    %c0_i32_0 = arith.constant 0 : i32
    %c0_i32_1 = arith.constant 0 : i32
    return %c0_i32, %c0_i32_0 : i32, i32
  }
  func.func @transform_2(%arg0: i32) -> (i32, i32) {
    %c0_i32 = arith.constant 0 : i32
    %c0_i32_0 = arith.constant 0 : i32
    %c0_i32_1 = arith.constant 0 : i32
    return %c0_i32, %c0_i32_0 : i32, i32
  }
  func.func @transform_3(%arg0: i32) -> (i32, i32) {
    %c0_i32 = arith.constant 0 : i32
    %c0_i32_0 = arith.constant 0 : i32
    return %arg0, %c0_i32 : i32, i32
  }
}

</mosaic_0001>

<llo_original>
// kernel: tpu_custom_call.1
$region0: #{tpu_custom_call.1}
  #allocation0 [shape = 'u32[]', space=smem, size = 0x4, offset = 0x4, fixed_abs, tag = 'smem constant byte address 0x4 - core index']
  #allocation1 [shape = 'u32[144,128]{1,0:T(1,128)}', space=vmem, size = 0x12000, scoped, tag = 'internal scratch']
  %s0 = inlined_call_operand.vmem [shape: f32[2,1568], index: 0, kind: input, shape index: {}]
  %s1 = inlined_call_operand.vmem [shape: f32[1568,10], index: 1, kind: input, shape index: {}]
  %s2 = inlined_call_operand.vmem [shape: f32[1,10], index: 2, kind: input, shape index: {}]
  %s3 = inlined_call_operand.hbm [shape: f32[2,10], index: 3, kind: output, shape index: {}]
  %s4 = sld [smem:[#allocation0]]
  $region22: #{tpu_custom_call.1} parent=0
    _
  %s6 = ssub.s32 1, %s4
  %s7 = scalar_select 0, %s6, %s4
  $region1: #{tpu_custom_call.1} parent=0
    #allocation2 [shape = 'u8[4096]{0}', space=vmem, size = 0x1000, scoped, tag = 'output window, operand 0, single buffered']
    #allocation3 [shape = 's32[1]{0}', space=sflag, size = 0x4, scoped, tag = 'scoped memory for tpu_custom_call.1']
    %8 = vsyncpa [#allocation3], 0
    // Predicated region
    $region2: #{tpu_custom_call.1} parent=1 // pred_check
      _
    $region3: #{tpu_custom_call.1} parent=1 // pred_check_branch
      %10 = sbr.rel (0) target = $region5
    $region4: #{tpu_custom_call.1} parent=1 // pred_region
      _
    $region5: #{tpu_custom_call.1} parent=1 // pred_fallthru
      _
    // Predicated region
    $region6: #{tpu_custom_call.1} parent=1 // pred_check
      _
    $region7: #{tpu_custom_call.1} parent=1 // pred_check_branch
      %12 = sbr.rel (0) target = $region9
    $region8: #{tpu_custom_call.1} parent=1 // pred_region
      _
    $region9: #{tpu_custom_call.1} parent=1 // pred_fallthru
      _
    // Predicated region
    $region10: #{tpu_custom_call.1} parent=1 // pred_check
      _
    $region11: #{tpu_custom_call.1} parent=1 // pred_check_branch
      %14 = sbr.rel (0) target = $region13
    $region12: #{tpu_custom_call.1} parent=1 // pred_region
      _
    $region13: #{tpu_custom_call.1} parent=1 // pred_fallthru
      _
    %v15 = vld [vmem:[%s0] sm:$0xff]
    %v16 = vld [vmem:[%s0 + $0x8] sm:$0xff]
    %v17 = vld [vmem:[%s0 + $0x10] sm:$0xff]
    %v18 = vld [vmem:[%s0 + $0x18] sm:$0x3]
    %v19 = vld [vmem:[%s0 + $0x1a] sm:$0xff]
    %v20 = vld [vmem:[%s0 + $0x22] sm:$0xff]
    %v21 = vld [vmem:[%s0 + $0x2a] sm:$0xff]
    %v22 = vld [vmem:[%s0 + $0x32] sm:$0x3]
    %v23 = vld [vmem:[%s0 + $0x34] sm:$0xff]
    %v24 = vld [vmem:[%s0 + $0x3c] sm:$0xff]
    %v25 = vld [vmem:[%s0 + $0x44] sm:$0xff]
    %v26 = vld [vmem:[%s0 + $0x4c] sm:$0x3]
    %v27 = vld [vmem:[%s0 + $0x4e] sm:$0xff]
    %v28 = vld [vmem:[%s0 + $0x56] sm:$0xff]
    %v29 = vld [vmem:[%s0 + $0x5e] sm:$0xff]
    %v30 = vld [vmem:[%s0 + $0x66] sm:$0x3]
    %v31 = vld [vmem:[%s1] sm:$0xff]
    %v32 = vld [vmem:[%s1 + $0x8] sm:$0xff]
    %v33 = vld [vmem:[%s1 + $0x10] sm:$0xff]
    %v34 = vld [vmem:[%s1 + $0x18] sm:$0xff]
    %v35 = vld [vmem:[%s1 + $0x20] sm:$0xff]
    %v36 = vld [vmem:[%s1 + $0x28] sm:$0xff]
    %v37 = vld [vmem:[%s1 + $0x30] sm:$0xff]
    %v38 = vld [vmem:[%s1 + $0x38] sm:$0xff]
    %v39 = vld [vmem:[%s1 + $0x40] sm:$0xff]
    %v40 = vld [vmem:[%s1 + $0x48] sm:$0xff]
    %v41 = vld [vmem:[%s1 + $0x50] sm:$0xff]
    %v42 = vld [vmem:[%s1 + $0x58] sm:$0xff]
    %v43 = vld [vmem:[%s1 + $0x60] sm:$0xff]
    %v44 = vld [vmem:[%s1 + $0x68] sm:$0xff]
    %v45 = vld [vmem:[%s1 + $0x70] sm:$0xff]
    %v46 = vld [vmem:[%s1 + $0x78] sm:$0xff]
    %v47 = vld [vmem:[%s1 + $0x80] sm:$0xff]
    %v48 = vld [vmem:[%s1 + $0x88] sm:$0xff]
    %v49 = vld [vmem:[%s1 + $0x90] sm:$0xff]
    %v50 = vld [vmem:[%s1 + $0x98] sm:$0xff]
    %v51 = vld [vmem:[%s1 + $0xa0] sm:$0xff]
    %v52 = vld [vmem:[%s1 + $0xa8] sm:$0xff]
    %v53 = vld [vmem:[%s1 + $0xb0] sm:$0xff]
    %v54 = vld [vmem:[%s1 + $0xb8] sm:$0xff]
    %v55 = vld [vmem:[%s1 + $0xc0] sm:$0xff]
    %v56 = vld [vmem:[%s1 + $0xc8] sm:$0xff]
    %v57 = vld [vmem:[%s1 + $0xd0] sm:$0xff]
    %v58 = vld [vmem:[%s1 + $0xd8] sm:$0xff]
    %v59 = vld [vmem:[%s1 + $0xe0] sm:$0xff]
    %v60 = vld [vmem:[%s1 + $0xe8] sm:$0xff]
    %v61 = vld [vmem:[%s1 + $0xf0] sm:$0xff]
    %v62 = vld [vmem:[%s1 + $0xf8] sm:$0xff]
    %v63 = vld [vmem:[%s1 + $0x100] sm:$0xff]
    %v64 = vld [vmem:[%s1 + $0x108] sm:$0xff]
    %v65 = vld [vmem:[%s1 + $0x110] sm:$0xff]
    %v66 = vld [vmem:[%s1 + $0x118] sm:$0xff]
    %v67 = vld [vmem:[%s1 + $0x120] sm:$0xff]
    %v68 = vld [vmem:[%s1 + $0x128] sm:$0xff]
    %v69 = vld [vmem:[%s1 + $0x130] sm:$0xff]
    %v70 = vld [vmem:[%s1 + $0x138] sm:$0xff]
    %v71 = vld [vmem:[%s1 + $0x140] sm:$0xff]
    %v72 = vld [vmem:[%s1 + $0x148] sm:$0xff]
    %v73 = vld [vmem:[%s1 + $0x150] sm:$0xff]
    %v74 = vld [vmem:[%s1 + $0x158] sm:$0xff]
    %v75 = vld [vmem:[%s1 + $0x160] sm:$0xff]
    %v76 = vld [vmem:[%s1 + $0x168] sm:$0xff]
    %v77 = vld [vmem:[%s1 + $0x170] sm:$0xff]
    %v78 = vld [vmem:[%s1 + $0x178] sm:$0xff]
    %v79 = vld [vmem:[%s1 + $0x180] sm:$0xff]
    %v80 = vld [vmem:[%s1 + $0x188] sm:$0xff]
    %v81 = vld [vmem:[%s1 + $0x190] sm:$0xff]
    %v82 = vld [vmem:[%s1 + $0x198] sm:$0xff]
    %v83 = vld [vmem:[%s1 + $0x1a0] sm:$0xff]
    %v84 = vld [vmem:[%s1 + $0x1a8] sm:$0xff]
    %v85 = vld [vmem:[%s1 + $0x1b0] sm:$0xff]
    %v86 = vld [vmem:[%s1 + $0x1b8] sm:$0xff]
    %v87 = vld [vmem:[%s1 + $0x1c0] sm:$0xff]
    %v88 = vld [vmem:[%s1 + $0x1c8] sm:$0xff]
    %v89 = vld [vmem:[%s1 + $0x1d0] sm:$0xff]
    %v90 = vld [vmem:[%s1 + $0x1d8] sm:$0xff]
    %v91 = vld [vmem:[%s1 + $0x1e0] sm:$0xff]
    %v92 = vld [vmem:[%s1 + $0x1e8] sm:$0xff]
    %v93 = vld [vmem:[%s1 + $0x1f0] sm:$0xff]
    %v94 = vld [vmem:[%s1 + $0x1f8] sm:$0xff]
    %v95 = vld [vmem:[%s1 + $0x200] sm:$0xff]
    %v96 = vld [vmem:[%s1 + $0x208] sm:$0xff]
    %v97 = vld [vmem:[%s1 + $0x210] sm:$0xff]
    %v98 = vld [vmem:[%s1 + $0x218] sm:$0xff]
    %v99 = vld [vmem:[%s1 + $0x220] sm:$0xff]
    %v100 = vld [vmem:[%s1 + $0x228] sm:$0xff]
    %v101 = vld [vmem:[%s1 + $0x230] sm:$0xff]
    %v102 = vld [vmem:[%s1 + $0x238] sm:$0xff]
    %v103 = vld [vmem:[%s1 + $0x240] sm:$0xff]
    %v104 = vld [vmem:[%s1 + $0x248] sm:$0xff]
    %v105 = vld [vmem:[%s1 + $0x250] sm:$0xff]
    %v106 = vld [vmem:[%s1 + $0x258] sm:$0xff]
    %v107 = vld [vmem:[%s1 + $0x260] sm:$0xff]
    %v108 = vld [vmem:[%s1 + $0x268] sm:$0xff]
    %v109 = vld [vmem:[%s1 + $0x270] sm:$0xff]
    %v110 = vld [vmem:[%s1 + $0x278] sm:$0xff]
    %v111 = vld [vmem:[%s1 + $0x280] sm:$0xff]
    %v112 = vld [vmem:[%s1 + $0x288] sm:$0xff]
    %v113 = vld [vmem:[%s1 + $0x290] sm:$0xff]
    %v114 = vld [vmem:[%s1 + $0x298] sm:$0xff]
    %v115 = vld [vmem:[%s1 + $0x2a0] sm:$0xff]
    %v116 = vld [vmem:[%s1 + $0x2a8] sm:$0xff]
    %v117 = vld [vmem:[%s1 + $0x2b0] sm:$0xff]
    %v118 = vld [vmem:[%s1 + $0x2b8] sm:$0xff]
    %v119 = vld [vmem:[%s1 + $0x2c0] sm:$0xff]
    %v120 = vld [vmem:[%s1 + $0x2c8] sm:$0xff]
    %v121 = vld [vmem:[%s1 + $0x2d0] sm:$0xff]
    %v122 = vld [vmem:[%s1 + $0x2d8] sm:$0xff]
    %v123 = vld [vmem:[%s1 + $0x2e0] sm:$0xff]
    %v124 = vld [vmem:[%s1 + $0x2e8] sm:$0xff]
    %v125 = vld [vmem:[%s1 + $0x2f0] sm:$0xff]
    %v126 = vld [vmem:[%s1 + $0x2f8] sm:$0xff]
    %v127 = vld [vmem:[%s1 + $0x300] sm:$0xff]
    %v128 = vld [vmem:[%s1 + $0x308] sm:$0xff]
    %v129 = vld [vmem:[%s1 + $0x310] sm:$0xff]
    %v130 = vld [vmem:[%s1 + $0x318] sm:$0xff]
    %v131 = vld [vmem:[%s1 + $0x320] sm:$0xff]
    %v132 = vld [vmem:[%s1 + $0x328] sm:$0xff]
    %v133 = vld [vmem:[%s1 + $0x330] sm:$0xff]
    %v134 = vld [vmem:[%s1 + $0x338] sm:$0xff]
    %v135 = vld [vmem:[%s1 + $0x340] sm:$0xff]
    %v136 = vld [vmem:[%s1 + $0x348] sm:$0xff]
    %v137 = vld [vmem:[%s1 + $0x350] sm:$0xff]
    %v138 = vld [vmem:[%s1 + $0x358] sm:$0xff]
    %v139 = vld [vmem:[%s1 + $0x360] sm:$0xff]
    %v140 = vld [vmem:[%s1 + $0x368] sm:$0xff]
    %v141 = vld [vmem:[%s1 + $0x370] sm:$0xff]
    %v142 = vld [vmem:[%s1 + $0x378] sm:$0xff]
    %v143 = vld [vmem:[%s1 + $0x380] sm:$0xff]
    %v144 = vld [vmem:[%s1 + $0x388] sm:$0xff]
    %v145 = vld [vmem:[%s1 + $0x390] sm:$0xff]
    %v146 = vld [vmem:[%s1 + $0x398] sm:$0xff]
    %v147 = vld [vmem:[%s1 + $0x3a0] sm:$0xff]
    %v148 = vld [vmem:[%s1 + $0x3a8] sm:$0xff]
    %v149 = vld [vmem:[%s1 + $0x3b0] sm:$0xff]
    %v150 = vld [vmem:[%s1 + $0x3b8] sm:$0xff]
    %v151 = vld [vmem:[%s1 + $0x3c0] sm:$0xff]
    %v152 = vld [vmem:[%s1 + $0x3c8] sm:$0xff]
    %v153 = vld [vmem:[%s1 + $0x3d0] sm:$0xff]
    %v154 = vld [vmem:[%s1 + $0x3d8] sm:$0xff]
    %v155 = vld [vmem:[%s1 + $0x3e0] sm:$0xff]
    %v156 = vld [vmem:[%s1 + $0x3e8] sm:$0xff]
    %v157 = vld [vmem:[%s1 + $0x3f0] sm:$0xff]
    %v158 = vld [vmem:[%s1 + $0x3f8] sm:$0xff]
    %v159 = vld [vmem:[%s1 + $0x400] sm:$0xff]
    %v160 = vld [vmem:[%s1 + $0x408] sm:$0xff]
    %v161 = vld [vmem:[%s1 + $0x410] sm:$0xff]
    %v162 = vld [vmem:[%s1 + $0x418] sm:$0xff]
    %v163 = vld [vmem:[%s1 + $0x420] sm:$0xff]
    %v164 = vld [vmem:[%s1 + $0x428] sm:$0xff]
    %v165 = vld [vmem:[%s1 + $0x430] sm:$0xff]
    %v166 = vld [vmem:[%s1 + $0x438] sm:$0xff]
    %v167 = vld [vmem:[%s1 + $0x440] sm:$0xff]
    %v168 = vld [vmem:[%s1 + $0x448] sm:$0xff]
    %v169 = vld [vmem:[%s1 + $0x450] sm:$0xff]
    %v170 = vld [vmem:[%s1 + $0x458] sm:$0xff]
    %v171 = vld [vmem:[%s1 + $0x460] sm:$0xff]
    %v172 = vld [vmem:[%s1 + $0x468] sm:$0xff]
    %v173 = vld [vmem:[%s1 + $0x470] sm:$0xff]
    %v174 = vld [vmem:[%s1 + $0x478] sm:$0xff]
    %v175 = vld [vmem:[%s1 + $0x480] sm:$0xff]
    %v176 = vld [vmem:[%s1 + $0x488] sm:$0xff]
    %v177 = vld [vmem:[%s1 + $0x490] sm:$0xff]
    %v178 = vld [vmem:[%s1 + $0x498] sm:$0xff]
    %v179 = vld [vmem:[%s1 + $0x4a0] sm:$0xff]
    %v180 = vld [vmem:[%s1 + $0x4a8] sm:$0xff]
    %v181 = vld [vmem:[%s1 + $0x4b0] sm:$0xff]
    %v182 = vld [vmem:[%s1 + $0x4b8] sm:$0xff]
    %v183 = vld [vmem:[%s1 + $0x4c0] sm:$0xff]
    %v184 = vld [vmem:[%s1 + $0x4c8] sm:$0xff]
    %v185 = vld [vmem:[%s1 + $0x4d0] sm:$0xff]
    %v186 = vld [vmem:[%s1 + $0x4d8] sm:$0xff]
    %v187 = vld [vmem:[%s1 + $0x4e0] sm:$0xff]
    %v188 = vld [vmem:[%s1 + $0x4e8] sm:$0xff]
    %v189 = vld [vmem:[%s1 + $0x4f0] sm:$0xff]
    %v190 = vld [vmem:[%s1 + $0x4f8] sm:$0xff]
    %v191 = vld [vmem:[%s1 + $0x500] sm:$0xff]
    %v192 = vld [vmem:[%s1 + $0x508] sm:$0xff]
    %v193 = vld [vmem:[%s1 + $0x510] sm:$0xff]
    %v194 = vld [vmem:[%s1 + $0x518] sm:$0xff]
    %v195 = vld [vmem:[%s1 + $0x520] sm:$0xff]
    %v196 = vld [vmem:[%s1 + $0x528] sm:$0xff]
    %v197 = vld [vmem:[%s1 + $0x530] sm:$0xff]
    %v198 = vld [vmem:[%s1 + $0x538] sm:$0xff]
    %v199 = vld [vmem:[%s1 + $0x540] sm:$0xff]
    %v200 = vld [vmem:[%s1 + $0x548] sm:$0xff]
    %v201 = vld [vmem:[%s1 + $0x550] sm:$0xff]
    %v202 = vld [vmem:[%s1 + $0x558] sm:$0xff]
    %v203 = vld [vmem:[%s1 + $0x560] sm:$0xff]
    %v204 = vld [vmem:[%s1 + $0x568] sm:$0xff]
    %v205 = vld [vmem:[%s1 + $0x570] sm:$0xff]
    %v206 = vld [vmem:[%s1 + $0x578] sm:$0xff]
    %v207 = vld [vmem:[%s1 + $0x580] sm:$0xff]
    %v208 = vld [vmem:[%s1 + $0x588] sm:$0xff]
    %v209 = vld [vmem:[%s1 + $0x590] sm:$0xff]
    %v210 = vld [vmem:[%s1 + $0x598] sm:$0xff]
    %v211 = vld [vmem:[%s1 + $0x5a0] sm:$0xff]
    %v212 = vld [vmem:[%s1 + $0x5a8] sm:$0xff]
    %v213 = vld [vmem:[%s1 + $0x5b0] sm:$0xff]
    %v214 = vld [vmem:[%s1 + $0x5b8] sm:$0xff]
    %v215 = vld [vmem:[%s1 + $0x5c0] sm:$0xff]
    %v216 = vld [vmem:[%s1 + $0x5c8] sm:$0xff]
    %v217 = vld [vmem:[%s1 + $0x5d0] sm:$0xff]
    %v218 = vld [vmem:[%s1 + $0x5d8] sm:$0xff]
    %v219 = vld [vmem:[%s1 + $0x5e0] sm:$0xff]
    %v220 = vld [vmem:[%s1 + $0x5e8] sm:$0xff]
    %v221 = vld [vmem:[%s1 + $0x5f0] sm:$0xff]
    %v222 = vld [vmem:[%s1 + $0x5f8] sm:$0xff]
    %v223 = vld [vmem:[%s1 + $0x600] sm:$0xff]
    %v224 = vld [vmem:[%s1 + $0x608] sm:$0xff]
    %v225 = vld [vmem:[%s1 + $0x610] sm:$0xff]
    %v226 = vld [vmem:[%s1 + $0x618] sm:$0xff]
    %v227 = vld [vmem:[%s2] sm:$0x1]
    %v229 = vlaneseq
    %v230 = vshrl.u32 %v229, 7
    %v231 = vsub.s32 0, %v230
    %v232 = vrot.slane %v227, %v231
    %v250 = vcombine.low %v15, %v19
    %v251 = vcombine.high %v15, %v19
    %v252 = vcombine.low %v23, %v27
    %v253 = vcombine.high %v23, %v27
    %v255 = vunpack.c.l.s4 1983009808
    %v256 = vunpack.c.0.s8 %v255
    %v257 = vlaneseq
    %v258 = vshrl.u32 %v257, 7
    %v259 = vsub.s32 %v256, %v258
    %v260 = vrot.slane %v250, %v259
    %v262 = vunpack.c.l.s4 1983009808
    %v263 = vunpack.c.0.s8 %v262
    %v264 = vlaneseq
    %v265 = vshrl.u32 %v264, 7
    %v266 = vsub.s32 %v263, %v265
    %v267 = vrot.slane %v251, %v266
    %v269 = vunpack.c.l.s4 1983009808
    %v270 = vunpack.c.0.s8 %v269
    %v271 = vlaneseq
    %v272 = vshrl.u32 %v271, 7
    %v273 = vsub.s32 %v270, %v272
    %v274 = vrot.slane %v252, %v273
    %v276 = vunpack.c.l.s4 1983009808
    %v277 = vunpack.c.0.s8 %v276
    %v278 = vlaneseq
    %v279 = vshrl.u32 %v278, 7
    %v280 = vsub.s32 %v277, %v279
    %v281 = vrot.slane %v253, %v280
    %v282 = vcombine.low %v260, %v274
    %v283 = vcombine.high %v260, %v274
    %v284 = vcombine.low %v267, %v281
    %v285 = vcombine.high %v267, %v281
    %v286 = vcombine.low %v16, %v20
    %v287 = vcombine.high %v16, %v20
    %v288 = vcombine.low %v24, %v28
    %v289 = vcombine.high %v24, %v28
    %v291 = vunpack.c.l.s4 1983009808
    %v292 = vunpack.c.0.s8 %v291
    %v293 = vlaneseq
    %v294 = vshrl.u32 %v293, 7
    %v295 = vsub.s32 %v292, %v294
    %v296 = vrot.slane %v286, %v295
    %v298 = vunpack.c.l.s4 1983009808
    %v299 = vunpack.c.0.s8 %v298
    %v300 = vlaneseq
    %v301 = vshrl.u32 %v300, 7
    %v302 = vsub.s32 %v299, %v301
    %v303 = vrot.slane %v287, %v302
    %v305 = vunpack.c.l.s4 1983009808
    %v306 = vunpack.c.0.s8 %v305
    %v307 = vlaneseq
    %v308 = vshrl.u32 %v307, 7
    %v309 = vsub.s32 %v306, %v308
    %v310 = vrot.slane %v288, %v309
    %v312 = vunpack.c.l.s4 1983009808
    %v313 = vunpack.c.0.s8 %v312
    %v314 = vlaneseq
    %v315 = vshrl.u32 %v314, 7
    %v316 = vsub.s32 %v313, %v315
    %v317 = vrot.slane %v289, %v316
    %v318 = vcombine.low %v296, %v310
    %v319 = vcombine.high %v296, %v310
    %v320 = vcombine.low %v303, %v317
    %v321 = vcombine.high %v303, %v317
    %v322 = vcombine.low %v17, %v21
    %v323 = vcombine.high %v17, %v21
    %v324 = vcombine.low %v25, %v29
    %v325 = vcombine.high %v25, %v29
    %v327 = vunpack.c.l.s4 1983009808
    %v328 = vunpack.c.0.s8 %v327
    %v329 = vlaneseq
    %v330 = vshrl.u32 %v329, 7
    %v331 = vsub.s32 %v328, %v330
    %v332 = vrot.slane %v322, %v331
    %v334 = vunpack.c.l.s4 1983009808
    %v335 = vunpack.c.0.s8 %v334
    %v336 = vlaneseq
    %v337 = vshrl.u32 %v336, 7
    %v338 = vsub.s32 %v335, %v337
    %v339 = vrot.slane %v323, %v338
    %v341 = vunpack.c.l.s4 1983009808
    %v342 = vunpack.c.0.s8 %v341
    %v343 = vlaneseq
    %v344 = vshrl.u32 %v343, 7
    %v345 = vsub.s32 %v342, %v344
    %v346 = vrot.slane %v324, %v345
    %v348 = vunpack.c.l.s4 1983009808
    %v349 = vunpack.c.0.s8 %v348
    %v350 = vlaneseq
    %v351 = vshrl.u32 %v350, 7
    %v352 = vsub.s32 %v349, %v351
    %v353 = vrot.slane %v325, %v352
    %v354 = vcombine.low %v332, %v346
    %v355 = vcombine.high %v332, %v346
    %v356 = vcombine.low %v339, %v353
    %v357 = vcombine.high %v339, %v353
    %v358 = vcombine.low %v18, %v22
    %v359 = vcombine.low %v26, %v30
    %v361 = vunpack.c.l.s4 1983009808
    %v362 = vunpack.c.0.s8 %v361
    %v363 = vlaneseq
    %v364 = vshrl.u32 %v363, 7
    %v365 = vsub.s32 %v362, %v364
    %v366 = vrot.slane %v358, %v365
    %v368 = vunpack.c.l.s4 1983009808
    %v369 = vunpack.c.0.s8 %v368
    %v370 = vlaneseq
    %v371 = vshrl.u32 %v370, 7
    %v372 = vsub.s32 %v369, %v371
    %v373 = vrot.slane %v359, %v372
    %v374 = vcombine.low %v366, %v373
    %vm387 = vcmask 261120
    %v388 = vsel %vm387, %v374, 0
    %390 = vmatprep.subr.mxu0 0.0
    %391 = vmatpush1.msra.mxu0 %v46
    %392 = vmatprep.subr.mxu0 0.0
    %393 = vmatpush1.msra.mxu0 %v45
    %394 = vmatprep.subr.mxu0 0.0
    %395 = vmatpush1.msra.mxu0 %v44
    %396 = vmatprep.subr.mxu0 0.0
    %397 = vmatpush1.msra.mxu0 %v43
    %398 = vmatprep.subr.mxu0 0.0
    %399 = vmatpush1.msra.mxu0 %v42
    %400 = vmatprep.subr.mxu0 0.0
    %401 = vmatpush1.msra.mxu0 %v41
    %402 = vmatprep.subr.mxu0 0.0
    %403 = vmatpush1.msra.mxu0 %v40
    %404 = vmatprep.subr.mxu0 0.0
    %405 = vmatpush1.msra.mxu0 %v39
    %406 = vmatprep.subr.mxu0 0.0
    %407 = vmatpush1.msra.mxu0 %v38
    %408 = vmatprep.subr.mxu0 0.0
    %409 = vmatpush1.msra.mxu0 %v37
    %410 = vmatprep.subr.mxu0 0.0
    %411 = vmatpush1.msra.mxu0 %v36
    %412 = vmatprep.subr.mxu0 0.0
    %413 = vmatpush1.msra.mxu0 %v35
    %414 = vmatprep.subr.mxu0 0.0
    %415 = vmatpush1.msra.mxu0 %v34
    %416 = vmatprep.subr.mxu0 0.0
    %417 = vmatpush1.msra.mxu0 %v33
    %418 = vmatprep.subr.mxu0 0.0
    %419 = vmatpush1.msra.mxu0 %v32
    %420 = vmatprep.subr.mxu0 0.0
    %421 = vmatpush1.msra.mxu0 %v31
    %422 = vmatprep.subr.mxu0 0.0
    %423 = vmatpush2.msra.mxu0 %v62
    %424 = vmatprep.subr.mxu0 0.0
    %425 = vmatpush2.msra.mxu0 %v61
    %426 = vmatprep.subr.mxu0 0.0
    %427 = vmatpush2.msra.mxu0 %v60
    %428 = vmatprep.subr.mxu0 0.0
    %429 = vmatpush2.msra.mxu0 %v59
    %430 = vmatprep.subr.mxu0 0.0
    %431 = vmatpush2.msra.mxu0 %v58
    %432 = vmatprep.subr.mxu0 0.0
    %433 = vmatpush2.msra.mxu0 %v57
    %434 = vmatprep.subr.mxu0 0.0
    %435 = vmatpush2.msra.mxu0 %v56
    %436 = vmatprep.subr.mxu0 0.0
    %437 = vmatpush2.msra.mxu0 %v55
    %438 = vmatprep.subr.mxu0 0.0
    %439 = vmatpush2.msra.mxu0 %v54
    %440 = vmatprep.subr.mxu0 0.0
    %441 = vmatpush2.msra.mxu0 %v53
    %442 = vmatprep.subr.mxu0 0.0
    %443 = vmatpush2.msra.mxu0 %v52
    %444 = vmatprep.subr.mxu0 0.0
    %445 = vmatpush2.msra.mxu0 %v51
    %446 = vmatprep.subr.mxu0 0.0
    %447 = vmatpush2.msra.mxu0 %v50
    %448 = vmatprep.subr.mxu0 0.0
    %449 = vmatpush2.msra.mxu0 %v49
    %450 = vmatprep.subr.mxu0 0.0
    %451 = vmatpush2.msra.mxu0 %v48
    %452 = vmatprep.subr.mxu0 0.0
    %453 = vmatpush2.msra.mxu0 %v47
    %454 = vmatprep.mubr.f32.mxu0 %v283
    %455 = vmatmul.mubr.f32.gmra.mxu0 %v282
    %v456 = vpop.f32.mrf.mxu0
    %v457 = vadd.f32 %v232, %v456
    %v458 = vpop.f32.mrf.mxu0
    %459 = vdwg.mxu0
    %460 = vmatprep.subr.mxu0 0.0
    %461 = vmatpush1.msra.mxu0 %v78
    %462 = vmatprep.subr.mxu0 0.0
    %463 = vmatpush1.msra.mxu0 %v77
    %464 = vmatprep.subr.mxu0 0.0
    %465 = vmatpush1.msra.mxu0 %v76
    %466 = vmatprep.subr.mxu0 0.0
    %467 = vmatpush1.msra.mxu0 %v75
    %468 = vmatprep.subr.mxu0 0.0
    %469 = vmatpush1.msra.mxu0 %v74
    %470 = vmatprep.subr.mxu0 0.0
    %471 = vmatpush1.msra.mxu0 %v73
    %472 = vmatprep.subr.mxu0 0.0
    %473 = vmatpush1.msra.mxu0 %v72
    %474 = vmatprep.subr.mxu0 0.0
    %475 = vmatpush1.msra.mxu0 %v71
    %476 = vmatprep.subr.mxu0 0.0
    %477 = vmatpush1.msra.mxu0 %v70
    %478 = vmatprep.subr.mxu0 0.0
    %479 = vmatpush1.msra.mxu0 %v69
    %480 = vmatprep.subr.mxu0 0.0
    %481 = vmatpush1.msra.mxu0 %v68
    %482 = vmatprep.subr.mxu0 0.0
    %483 = vmatpush1.msra.mxu0 %v67
    %484 = vmatprep.subr.mxu0 0.0
    %485 = vmatpush1.msra.mxu0 %v66
    %486 = vmatprep.subr.mxu0 0.0
    %487 = vmatpush1.msra.mxu0 %v65
    %488 = vmatprep.subr.mxu0 0.0
    %489 = vmatpush1.msra.mxu0 %v64
    %490 = vmatprep.subr.mxu0 0.0
    %491 = vmatpush1.msra.mxu0 %v63
    %492 = vmatprep.subr.mxu0 0.0
    %493 = vmatpush2.msra.mxu0 %v94
    %494 = vmatprep.subr.mxu0 0.0
    %495 = vmatpush2.msra.mxu0 %v93
    %496 = vmatprep.subr.mxu0 0.0
    %497 = vmatpush2.msra.mxu0 %v92
    %498 = vmatprep.subr.mxu0 0.0
    %499 = vmatpush2.msra.mxu0 %v91
    %500 = vmatprep.subr.mxu0 0.0
    %501 = vmatpush2.msra.mxu0 %v90
    %502 = vmatprep.subr.mxu0 0.0
    %503 = vmatpush2.msra.mxu0 %v89
    %504 = vmatprep.subr.mxu0 0.0
    %505 = vmatpush2.msra.mxu0 %v88
    %506 = vmatprep.subr.mxu0 0.0
    %507 = vmatpush2.msra.mxu0 %v87
    %508 = vmatprep.subr.mxu0 0.0
    %509 = vmatpush2.msra.mxu0 %v86
    %510 = vmatprep.subr.mxu0 0.0
    %511 = vmatpush2.msra.mxu0 %v85
    %512 = vmatprep.subr.mxu0 0.0
    %513 = vmatpush2.msra.mxu0 %v84
    %514 = vmatprep.subr.mxu0 0.0
    %515 = vmatpush2.msra.mxu0 %v83
    %516 = vmatprep.subr.mxu0 0.0
    %517 = vmatpush2.msra.mxu0 %v82
    %518 = vmatprep.subr.mxu0 0.0
    %519 = vmatpush2.msra.mxu0 %v81
    %520 = vmatprep.subr.mxu0 0.0
    %521 = vmatpush2.msra.mxu0 %v80
    %522 = vmatprep.subr.mxu0 0.0
    %523 = vmatpush2.msra.mxu0 %v79
    %524 = vmatprep.mubr.f32.mxu0 %v285
    %525 = vmatmul.mubr.f32.gmra.mxu0 %v284
    %v526 = vpop.f32.mrf.mxu0
    %v527 = vadd.f32 %v457, %v526
    %v528 = vpop.f32.mrf.mxu0
    %529 = vdwg.mxu0
    %530 = vmatprep.subr.mxu0 0.0
    %531 = vmatpush1.msra.mxu0 %v110
    %532 = vmatprep.subr.mxu0 0.0
    %533 = vmatpush1.msra.mxu0 %v109
    %534 = vmatprep.subr.mxu0 0.0
    %535 = vmatpush1.msra.mxu0 %v108
    %536 = vmatprep.subr.mxu0 0.0
    %537 = vmatpush1.msra.mxu0 %v107
    %538 = vmatprep.subr.mxu0 0.0
    %539 = vmatpush1.msra.mxu0 %v106
    %540 = vmatprep.subr.mxu0 0.0
    %541 = vmatpush1.msra.mxu0 %v105
    %542 = vmatprep.subr.mxu0 0.0
    %543 = vmatpush1.msra.mxu0 %v104
    %544 = vmatprep.subr.mxu0 0.0
    %545 = vmatpush1.msra.mxu0 %v103
    %546 = vmatprep.subr.mxu0 0.0
    %547 = vmatpush1.msra.mxu0 %v102
    %548 = vmatprep.subr.mxu0 0.0
    %549 = vmatpush1.msra.mxu0 %v101
    %550 = vmatprep.subr.mxu0 0.0
    %551 = vmatpush1.msra.mxu0 %v100
    %552 = vmatprep.subr.mxu0 0.0
    %553 = vmatpush1.msra.mxu0 %v99
    %554 = vmatprep.subr.mxu0 0.0
    %555 = vmatpush1.msra.mxu0 %v98
    %556 = vmatprep.subr.mxu0 0.0
    %557 = vmatpush1.msra.mxu0 %v97
    %558 = vmatprep.subr.mxu0 0.0
    %559 = vmatpush1.msra.mxu0 %v96
    %560 = vmatprep.subr.mxu0 0.0
    %561 = vmatpush1.msra.mxu0 %v95
    %562 = vmatprep.subr.mxu0 0.0
    %563 = vmatpush2.msra.mxu0 %v126
    %564 = vmatprep.subr.mxu0 0.0
    %565 = vmatpush2.msra.mxu0 %v125
    %566 = vmatprep.subr.mxu0 0.0
    %567 = vmatpush2.msra.mxu0 %v124
    %568 = vmatprep.subr.mxu0 0.0
    %569 = vmatpush2.msra.mxu0 %v123
    %570 = vmatprep.subr.mxu0 0.0
    %571 = vmatpush2.msra.mxu0 %v122
    %572 = vmatprep.subr.mxu0 0.0
    %573 = vmatpush2.msra.mxu0 %v121
    %574 = vmatprep.subr.mxu0 0.0
    %575 = vmatpush2.msra.mxu0 %v120
    %576 = vmatprep.subr.mxu0 0.0
    %577 = vmatpush2.msra.mxu0 %v119
    %578 = vmatprep.subr.mxu0 0.0
    %579 = vmatpush2.msra.mxu0 %v118
    %580 = vmatprep.subr.mxu0 0.0
    %581 = vmatpush2.msra.mxu0 %v117
    %582 = vmatprep.subr.mxu0 0.0
    %583 = vmatpush2.msra.mxu0 %v116
    %584 = vmatprep.subr.mxu0 0.0
    %585 = vmatpush2.msra.mxu0 %v115
    %586 = vmatprep.subr.mxu0 0.0
    %587 = vmatpush2.msra.mxu0 %v114
    %588 = vmatprep.subr.mxu0 0.0
    %589 = vmatpush2.msra.mxu0 %v113
    %590 = vmatprep.subr.mxu0 0.0
    %591 = vmatpush2.msra.mxu0 %v112
    %592 = vmatprep.subr.mxu0 0.0
    %593 = vmatpush2.msra.mxu0 %v111
    %594 = vmatprep.mubr.f32.mxu0 %v319
    %595 = vmatmul.mubr.f32.gmra.mxu0 %v318
    %v596 = vpop.f32.mrf.mxu0
    %v597 = vadd.f32 %v527, %v596
    %v598 = vpop.f32.mrf.mxu0
    %599 = vdwg.mxu0
    %600 = vmatprep.subr.mxu0 0.0
    %601 = vmatpush1.msra.mxu0 %v142
    %602 = vmatprep.subr.mxu0 0.0
    %603 = vmatpush1.msra.mxu0 %v141
    %604 = vmatprep.subr.mxu0 0.0
    %605 = vmatpush1.msra.mxu0 %v140
    %606 = vmatprep.subr.mxu0 0.0
    %607 = vmatpush1.msra.mxu0 %v139
    %608 = vmatprep.subr.mxu0 0.0
    %609 = vmatpush1.msra.mxu0 %v138
    %610 = vmatprep.subr.mxu0 0.0
    %611 = vmatpush1.msra.mxu0 %v137
    %612 = vmatprep.subr.mxu0 0.0
    %613 = vmatpush1.msra.mxu0 %v136
    %614 = vmatprep.subr.mxu0 0.0
    %615 = vmatpush1.msra.mxu0 %v135
    %616 = vmatprep.subr.mxu0 0.0
    %617 = vmatpush1.msra.mxu0 %v134
    %618 = vmatprep.subr.mxu0 0.0
    %619 = vmatpush1.msra.mxu0 %v133
    %620 = vmatprep.subr.mxu0 0.0
    %621 = vmatpush1.msra.mxu0 %v132
    %622 = vmatprep.subr.mxu0 0.0
    %623 = vmatpush1.msra.mxu0 %v131
    %624 = vmatprep.subr.mxu0 0.0
    %625 = vmatpush1.msra.mxu0 %v130
    %626 = vmatprep.subr.mxu0 0.0
    %627 = vmatpush1.msra.mxu0 %v129
    %628 = vmatprep.subr.mxu0 0.0
    %629 = vmatpush1.msra.mxu0 %v128
    %630 = vmatprep.subr.mxu0 0.0
    %631 = vmatpush1.msra.mxu0 %v127
    %632 = vmatprep.subr.mxu0 0.0
    %633 = vmatpush2.msra.mxu0 %v158
    %634 = vmatprep.subr.mxu0 0.0
    %635 = vmatpush2.msra.mxu0 %v157
    %636 = vmatprep.subr.mxu0 0.0
    %637 = vmatpush2.msra.mxu0 %v156
    %638 = vmatprep.subr.mxu0 0.0
    %639 = vmatpush2.msra.mxu0 %v155
    %640 = vmatprep.subr.mxu0 0.0
    %641 = vmatpush2.msra.mxu0 %v154
    %642 = vmatprep.subr.mxu0 0.0
    %643 = vmatpush2.msra.mxu0 %v153
    %644 = vmatprep.subr.mxu0 0.0
    %645 = vmatpush2.msra.mxu0 %v152
    %646 = vmatprep.subr.mxu0 0.0
    %647 = vmatpush2.msra.mxu0 %v151
    %648 = vmatprep.subr.mxu0 0.0
    %649 = vmatpush2.msra.mxu0 %v150
    %650 = vmatprep.subr.mxu0 0.0
    %651 = vmatpush2.msra.mxu0 %v149
    %652 = vmatprep.subr.mxu0 0.0
    %653 = vmatpush2.msra.mxu0 %v148
    %654 = vmatprep.subr.mxu0 0.0
    %655 = vmatpush2.msra.mxu0 %v147
    %656 = vmatprep.subr.mxu0 0.0
    %657 = vmatpush2.msra.mxu0 %v146
    %658 = vmatprep.subr.mxu0 0.0
    %659 = vmatpush2.msra.mxu0 %v145
    %660 = vmatprep.subr.mxu0 0.0
    %661 = vmatpush2.msra.mxu0 %v144
    %662 = vmatprep.subr.mxu0 0.0
    %663 = vmatpush2.msra.mxu0 %v143
    %664 = vmatprep.mubr.f32.mxu0 %v321
    %665 = vmatmul.mubr.f32.gmra.mxu0 %v320
    %v666 = vpop.f32.mrf.mxu0
    %v667 = vadd.f32 %v597, %v666
    %v668 = vpop.f32.mrf.mxu0
    %669 = vdwg.mxu0
    %670 = vmatprep.subr.mxu0 0.0
    %671 = vmatpush1.msra.mxu0 %v174
    %672 = vmatprep.subr.mxu0 0.0
    %673 = vmatpush1.msra.mxu0 %v173
    %674 = vmatprep.subr.mxu0 0.0
    %675 = vmatpush1.msra.mxu0 %v172
    %676 = vmatprep.subr.mxu0 0.0
    %677 = vmatpush1.msra.mxu0 %v171
    %678 = vmatprep.subr.mxu0 0.0
    %679 = vmatpush1.msra.mxu0 %v170
    %680 = vmatprep.subr.mxu0 0.0
    %681 = vmatpush1.msra.mxu0 %v169
    %682 = vmatprep.subr.mxu0 0.0
    %683 = vmatpush1.msra.mxu0 %v168
    %684 = vmatprep.subr.mxu0 0.0
    %685 = vmatpush1.msra.mxu0 %v167
    %686 = vmatprep.subr.mxu0 0.0
    %687 = vmatpush1.msra.mxu0 %v166
    %688 = vmatprep.subr.mxu0 0.0
    %689 = vmatpush1.msra.mxu0 %v165
    %690 = vmatprep.subr.mxu0 0.0
    %691 = vmatpush1.msra.mxu0 %v164
    %692 = vmatprep.subr.mxu0 0.0
    %693 = vmatpush1.msra.mxu0 %v163
    %694 = vmatprep.subr.mxu0 0.0
    %695 = vmatpush1.msra.mxu0 %v162
    %696 = vmatprep.subr.mxu0 0.0
    %697 = vmatpush1.msra.mxu0 %v161
    %698 = vmatprep.subr.mxu0 0.0
    %699 = vmatpush1.msra.mxu0 %v160
    %700 = vmatprep.subr.mxu0 0.0
    %701 = vmatpush1.msra.mxu0 %v159
    %702 = vmatprep.subr.mxu0 0.0
    %703 = vmatpush2.msra.mxu0 %v190
    %704 = vmatprep.subr.mxu0 0.0
    %705 = vmatpush2.msra.mxu0 %v189
    %706 = vmatprep.subr.mxu0 0.0
    %707 = vmatpush2.msra.mxu0 %v188
    %708 = vmatprep.subr.mxu0 0.0
    %709 = vmatpush2.msra.mxu0 %v187
    %710 = vmatprep.subr.mxu0 0.0
    %711 = vmatpush2.msra.mxu0 %v186
    %712 = vmatprep.subr.mxu0 0.0
    %713 = vmatpush2.msra.mxu0 %v185
    %714 = vmatprep.subr.mxu0 0.0
    %715 = vmatpush2.msra.mxu0 %v184
    %716 = vmatprep.subr.mxu0 0.0
    %717 = vmatpush2.msra.mxu0 %v183
    %718 = vmatprep.subr.mxu0 0.0
    %719 = vmatpush2.msra.mxu0 %v182
    %720 = vmatprep.subr.mxu0 0.0
    %721 = vmatpush2.msra.mxu0 %v181
    %722 = vmatprep.subr.mxu0 0.0
    %723 = vmatpush2.msra.mxu0 %v180
    %724 = vmatprep.subr.mxu0 0.0
    %725 = vmatpush2.msra.mxu0 %v179
    %726 = vmatprep.subr.mxu0 0.0
    %727 = vmatpush2.msra.mxu0 %v178
    %728 = vmatprep.subr.mxu0 0.0
    %729 = vmatpush2.msra.mxu0 %v177
    %730 = vmatprep.subr.mxu0 0.0
    %731 = vmatpush2.msra.mxu0 %v176
    %732 = vmatprep.subr.mxu0 0.0
    %733 = vmatpush2.msra.mxu0 %v175
    %734 = vmatprep.mubr.f32.mxu0 %v355
    %735 = vmatmul.mubr.f32.gmra.mxu0 %v354
    %v736 = vpop.f32.mrf.mxu0
    %v737 = vadd.f32 %v667, %v736
    %v738 = vpop.f32.mrf.mxu0
    %739 = vdwg.mxu0
    %740 = vmatprep.subr.mxu0 0.0
    %741 = vmatpush1.msra.mxu0 %v206
    %742 = vmatprep.subr.mxu0 0.0
    %743 = vmatpush1.msra.mxu0 %v205
    %744 = vmatprep.subr.mxu0 0.0
    %745 = vmatpush1.msra.mxu0 %v204
    %746 = vmatprep.subr.mxu0 0.0
    %747 = vmatpush1.msra.mxu0 %v203
    %748 = vmatprep.subr.mxu0 0.0
    %749 = vmatpush1.msra.mxu0 %v202
    %750 = vmatprep.subr.mxu0 0.0
    %751 = vmatpush1.msra.mxu0 %v201
    %752 = vmatprep.subr.mxu0 0.0
    %753 = vmatpush1.msra.mxu0 %v200
    %754 = vmatprep.subr.mxu0 0.0
    %755 = vmatpush1.msra.mxu0 %v199
    %756 = vmatprep.subr.mxu0 0.0
    %757 = vmatpush1.msra.mxu0 %v198
    %758 = vmatprep.subr.mxu0 0.0
    %759 = vmatpush1.msra.mxu0 %v197
    %760 = vmatprep.subr.mxu0 0.0
    %761 = vmatpush1.msra.mxu0 %v196
    %762 = vmatprep.subr.mxu0 0.0
    %763 = vmatpush1.msra.mxu0 %v195
    %764 = vmatprep.subr.mxu0 0.0
    %765 = vmatpush1.msra.mxu0 %v194
    %766 = vmatprep.subr.mxu0 0.0
    %767 = vmatpush1.msra.mxu0 %v193
    %768 = vmatprep.subr.mxu0 0.0
    %769 = vmatpush1.msra.mxu0 %v192
    %770 = vmatprep.subr.mxu0 0.0
    %771 = vmatpush1.msra.mxu0 %v191
    %772 = vmatprep.subr.mxu0 0.0
    %773 = vmatpush2.msra.mxu0 %v222
    %774 = vmatprep.subr.mxu0 0.0
    %775 = vmatpush2.msra.mxu0 %v221
    %776 = vmatprep.subr.mxu0 0.0
    %777 = vmatpush2.msra.mxu0 %v220
    %778 = vmatprep.subr.mxu0 0.0
    %779 = vmatpush2.msra.mxu0 %v219
    %780 = vmatprep.subr.mxu0 0.0
    %781 = vmatpush2.msra.mxu0 %v218
    %782 = vmatprep.subr.mxu0 0.0
    %783 = vmatpush2.msra.mxu0 %v217
    %784 = vmatprep.subr.mxu0 0.0
    %785 = vmatpush2.msra.mxu0 %v216
    %786 = vmatprep.subr.mxu0 0.0
    %787 = vmatpush2.msra.mxu0 %v215
    %788 = vmatprep.subr.mxu0 0.0
    %789 = vmatpush2.msra.mxu0 %v214
    %790 = vmatprep.subr.mxu0 0.0
    %791 = vmatpush2.msra.mxu0 %v213
    %792 = vmatprep.subr.mxu0 0.0
    %793 = vmatpush2.msra.mxu0 %v212
    %794 = vmatprep.subr.mxu0 0.0
    %795 = vmatpush2.msra.mxu0 %v211
    %796 = vmatprep.subr.mxu0 0.0
    %797 = vmatpush2.msra.mxu0 %v210
    %798 = vmatprep.subr.mxu0 0.0
    %799 = vmatpush2.msra.mxu0 %v209
    %800 = vmatprep.subr.mxu0 0.0
    %801 = vmatpush2.msra.mxu0 %v208
    %802 = vmatprep.subr.mxu0 0.0
    %803 = vmatpush2.msra.mxu0 %v207
    %804 = vmatprep.mubr.f32.mxu0 %v357
    %805 = vmatmul.mubr.f32.gmra.mxu0 %v356
    %v806 = vpop.f32.mrf.mxu0
    %v807 = vadd.f32 %v737, %v806
    %v808 = vpop.f32.mrf.mxu0
    %809 = vdwg.mxu0
    %810 = vmatprep.subr.mxu0 0.0
    %811 = vmatpush1.msra.mxu0 0.0
    %812 = vmatprep.subr.mxu0 0.0
    %813 = vmatpush1.msra.mxu0 0.0
    %814 = vmatprep.subr.mxu0 0.0
    %815 = vmatpush1.msra.mxu0 0.0
    %816 = vmatprep.subr.mxu0 0.0
    %817 = vmatpush1.msra.mxu0 0.0
    %818 = vmatprep.subr.mxu0 0.0
    %819 = vmatpush1.msra.mxu0 0.0
    %820 = vmatprep.subr.mxu0 0.0
    %821 = vmatpush1.msra.mxu0 0.0
    %822 = vmatprep.subr.mxu0 0.0
    %823 = vmatpush1.msra.mxu0 0.0
    %824 = vmatprep.subr.mxu0 0.0
    %825 = vmatpush1.msra.mxu0 0.0
    %826 = vmatprep.subr.mxu0 0.0
    %827 = vmatpush1.msra.mxu0 0.0
    %828 = vmatprep.subr.mxu0 0.0
    %829 = vmatpush1.msra.mxu0 0.0
    %830 = vmatprep.subr.mxu0 0.0
    %831 = vmatpush1.msra.mxu0 0.0
    %832 = vmatprep.subr.mxu0 0.0
    %833 = vmatpush1.msra.mxu0 0.0
    %834 = vmatprep.subr.mxu0 0.0
    %835 = vmatpush1.msra.mxu0 %v226
    %836 = vmatprep.subr.mxu0 0.0
    %837 = vmatpush1.msra.mxu0 %v225
    %838 = vmatprep.subr.mxu0 0.0
    %839 = vmatpush1.msra.mxu0 %v224
    %840 = vmatprep.subr.mxu0 0.0
    %841 = vmatpush1.msra.mxu0 %v223
    %842 = vmatprep.subr.mxu0 0.0
    %843 = vmatpush2.msra.mxu0 0.0
    %844 = vmatprep.subr.mxu0 0.0
    %845 = vmatpush2.msra.mxu0 0.0
    %846 = vmatprep.subr.mxu0 0.0
    %847 = vmatpush2.msra.mxu0 0.0
    %848 = vmatprep.subr.mxu0 0.0
    %849 = vmatpush2.msra.mxu0 0.0
    %850 = vmatprep.subr.mxu0 0.0
    %851 = vmatpush2.msra.mxu0 0.0
    %852 = vmatprep.subr.mxu0 0.0
    %853 = vmatpush2.msra.mxu0 0.0
    %854 = vmatprep.subr.mxu0 0.0
    %855 = vmatpush2.msra.mxu0 0.0
    %856 = vmatprep.subr.mxu0 0.0
    %857 = vmatpush2.msra.mxu0 0.0
    %858 = vmatprep.subr.mxu0 0.0
    %859 = vmatpush2.msra.mxu0 0.0
    %860 = vmatprep.subr.mxu0 0.0
    %861 = vmatpush2.msra.mxu0 0.0
    %862 = vmatprep.subr.mxu0 0.0
    %863 = vmatpush2.msra.mxu0 0.0
    %864 = vmatprep.subr.mxu0 0.0
    %865 = vmatpush2.msra.mxu0 0.0
    %866 = vmatprep.subr.mxu0 0.0
    %867 = vmatpush2.msra.mxu0 0.0
    %868 = vmatprep.subr.mxu0 0.0
    %869 = vmatpush2.msra.mxu0 0.0
    %870 = vmatprep.subr.mxu0 0.0
    %871 = vmatpush2.msra.mxu0 0.0
    %872 = vmatprep.subr.mxu0 0.0
    %873 = vmatpush2.msra.mxu0 0.0
    %874 = vmatprep.mubr.f32.mxu0 0.0
    %875 = vmatmul.mubr.f32.gmra.mxu0 %v388
    %v876 = vpop.f32.mrf.mxu0
    %v877 = vadd.f32 %v807, %v876
    %v878 = vpop.f32.mrf.mxu0
    %879 = vdwg.mxu0
    %vm880 = vcmask 80896
    %881 = vst.msk [vmem:[#allocation2] sm:$0xff] %vm880, %v877
    // Predicated region
    $region14: #{tpu_custom_call.1} parent=1 // pred_check
      _
    $region15: #{tpu_custom_call.1} parent=1 // pred_check_branch
      %883 = sbr.rel (0) target = $region17
    $region16: #{tpu_custom_call.1} parent=1 // pred_region
      %s885 = ssub.s32 128, 32
      %886 = vsyncadd [#allocation3], %s885
      %s887 = sshll.u32 [#allocation2], 4
      %s888 = int_to_ptr.vmem [resolvable:$true] %s887
      %893 = dma.vmem_to_hbm [thread:$0]  %s888, 32, %s3, [#allocation3], 32, 32, 2
    $region17: #{tpu_custom_call.1} parent=1 // pred_fallthru
      _
    // Predicated region
    $region18: #{tpu_custom_call.1} parent=1 // pred_check
      _
    $region19: #{tpu_custom_call.1} parent=1 // pred_check_branch
      %895 = sbr.rel (0) target = $region21
    $region20: #{tpu_custom_call.1} parent=1 // pred_region
      %896 = dma.done [#allocation3], 128
    $region21: #{tpu_custom_call.1} parent=1 // pred_fallthru
      _
    %897 = vsyncpa [#allocation3], 1

</llo_original>
